<compile_context>
chip_gen: v7x
topology: tpu7x:2x2x1
jax: 0.10.0
libtpu: 0.0.40
codegen_flags: <defaults>
</compile_context>

<pallas_src>
import functools

import jax
import jax.numpy as jnp
from jax import lax
from jax.experimental import pallas as pl
from jax.experimental.pallas import tpu as pltpu

EPS = 1e-5  # the module's _cosine_distance_and_angle default (not torch's 1e-8)


def _acos_f32(x):
    """Elementwise arccos for x in [-1+eps, 1-eps] (Cephes asin poly, ~1e-6 err).

    Single polynomial evaluation; only mul/add/sqrt/select so it lowers cleanly
    in Mosaic (TPU has no native acos transcendental).
    """
    a = jnp.abs(x)
    hi = a > 0.5
    # |x| > 0.5: acos(|x|) = 2*asin(sqrt((1-|x|)/2));  |x| <= 0.5: pi/2 - asin(|x|)
    t = jnp.where(hi, jnp.sqrt(0.5 * (1.0 - a)), a)   # clip guarantees 1-a >= eps
    z = t * t
    p = ((((4.2163199048e-2 * z + 2.4181311049e-2) * z + 4.5470025998e-2) * z
          + 7.4953002686e-2) * z + 1.6666752422e-1) * z * t + t
    r = jnp.where(hi, 2.0 * p, 0.5 * jnp.pi - p)
    return jnp.where(x < 0.0, jnp.pi - r, r)           # acos(-x) = pi - acos(x)


def _color_loss_kernel(x_ref, y_ref, sim_out, ang_out, acc_sim, acc_ang,
                       *, hw8, tile, num_tiles, tiles_per_p, ragged):
    # x_ref, y_ref: (B_t, C, SUB, TP) block of the (N, C, SUB, HW8) operands.
    # acc_sim/acc_ang: (SUB, TP) f32 accumulators, resident across the tile axis.
    t = pl.program_id(2)

    @pl.when(t == 0)
    def _init():
        acc_sim[...] = jnp.zeros_like(acc_sim)
        acc_ang[...] = jnp.zeros_like(acc_ang)

    x = x_ref[...].astype(jnp.float32)
    y = y_ref[...].astype(jnp.float32)

    # Channel reduction over small axis 1 -> dense (B_t, SUB, TP) vregs.
    dot = jnp.sum(x * y, axis=1)
    nx2 = jnp.sum(x * x, axis=1)
    ny2 = jnp.sum(y * y, axis=1)

    # 1 / max(||v||, eps) == rsqrt(max(||v||^2, eps^2))  (EUP slot, off the VALU)
    inv_nx = lax.rsqrt(jnp.maximum(nx2, EPS * EPS))
    inv_ny = lax.rsqrt(jnp.maximum(ny2, EPS * EPS))
    sim = dot * inv_nx * inv_ny
    ang = _acos_f32(jnp.clip(sim, -1.0 + EPS, 1.0 - EPS))

    sim_part = jnp.sum(sim, axis=0)      # fold batch-tile: elementwise vreg adds
    ang_part = jnp.sum(ang, axis=0)

    if ragged:
        # Only the last global pixel tile is partial; mask it there, nowhere else.
        g = pl.program_id(1) * tiles_per_p + t        # global pixel-tile index
        is_tail = g == num_tiles - 1

        @pl.when(is_tail)
        def _tail():
            lane = lax.broadcasted_iota(jnp.int32, sim.shape, dimension=sim.ndim - 1)
            valid = (g * tile + lane) < hw8
            # Keep this a select (not a multiply): padded data may be NaN/Inf.
            acc_sim[...] += jnp.sum(jnp.where(valid, sim, 0.0), axis=0)
            acc_ang[...] += jnp.sum(jnp.where(valid, ang, 0.0), axis=0)

        @pl.when(jnp.logical_not(is_tail))
        def _body():
            acc_sim[...] += sim_part
            acc_ang[...] += ang_part
    else:
        acc_sim[...] += sim_part
        acc_ang[...] += ang_part

    @pl.when(t == pl.num_programs(2) - 1)
    def _finalize():
        sim_out[...] = jnp.full(sim_out.shape, jnp.sum(acc_sim[...]), jnp.float32)
        ang_out[...] = jnp.full(ang_out.shape, jnp.sum(acc_ang[...]), jnp.float32)


def _pick_sub(hw, itemsize):
    """Sublane packing: dtype-native density, largest power of two dividing HW."""
    native = max(8, 32 // max(1, itemsize))    # 8 (f32), 16 (bf16/f16), 32 (8-bit)
    sub = native
    while sub > 1 and hw % sub:
        sub //= 2
    # TODO(synk): odd H*W still degrades to sub=1; pad HW to a multiple of 8 in
    # the wrapper (and extend the mask) if that case ever matters.
    return sub


def _pick_tiles(n, c, hw8, sub, itemsize, target_block_bytes):
    """Lane tile over packed pixels + batch-tile fold for small images."""
    per_lane_bytes = c * sub * itemsize
    tp = target_block_bytes // max(1, per_lane_bytes)
    tp = max(128, (tp // 128) * 128)
    if tp >= hw8:
        # Whole packed image fits in one lane tile: fold batches into the block
        # to amortize per-grid-step and DMA-descriptor overhead.
        tp = hw8
        bt = 1
        for b in range(n, 0, -1):
            if n % b == 0 and b * hw8 * per_lane_bytes <= target_block_bytes:
                bt = b
                break
        return bt, tp, 1
    return 1, tp, pl.cdiv(hw8, tp)


def color_loss(x, y, *, target_block_bytes=4 << 20):
    """x, y: (N, C, H, W) float arrays (any float dtype). Returns scalar f32 loss."""
    assert x.shape == y.shape and x.ndim == 4
    n, c, h, w = x.shape
    hw = h * w
    itemsize = jnp.dtype(x.dtype).itemsize

    # Free, contiguous reshape (no HBM transpose); keep native dtype for DMA.
    sub = _pick_sub(hw, itemsize)
    hw8 = hw // sub
    x4 = x.reshape(n, c, sub, hw8)
    y4 = y.reshape(n, c, sub, hw8)

    bt, tp, num_tiles = _pick_tiles(n, c, hw8, sub, itemsize, target_block_bytes)
    nb = n // bt
    ragged = (hw8 % tp) != 0

    # Second "parallel" grid axis over pixel tiles when only one batch block
    # exists, so both TensorCores are busy on v7x.
    if nb == 1 and num_tiles >= 2 and num_tiles % 2 == 0:
        pdim, tiles_per_p = 2, num_tiles // 2
    else:
        pdim, tiles_per_p = 1, num_tiles

    # VMEM budget from the actual footprint: 2 inputs x 2 pipeline buffers x
    # block + 2 f32 accumulators + double-buffered (8,128) outputs.  Capped at
    # 64 MiB (v7x physical VMEM); default target keeps it well under ~48 MiB.
    block_bytes = bt * c * sub * tp * itemsize
    footprint = 4 * block_bytes + 2 * sub * tp * 4 + 4 * 8 * 128 * 4
    vmem_limit = int(min(64 << 20, max(32 << 20, 2 * footprint)))

    kernel = functools.partial(_color_loss_kernel, hw8=hw8, tile=tp,
                               num_tiles=num_tiles, tiles_per_p=tiles_per_p,
                               ragged=ragged)

    def in_index(i, p, t, _tpp=tiles_per_p):
        return (i, 0, 0, p * _tpp + t)

    in_spec = pl.BlockSpec((bt, c, sub, tp), in_index)
    out_spec = pl.BlockSpec((1, 1, 8, 128), lambda i, p, t: (i, p, 0, 0))

    out_sim, out_ang = pl.pallas_call(
        kernel,
        out_shape=(jax.ShapeDtypeStruct((nb, pdim, 8, 128), jnp.float32),
                   jax.ShapeDtypeStruct((nb, pdim, 8, 128), jnp.float32)),
        grid=(nb, pdim, tiles_per_p),
        in_specs=[in_spec, in_spec],
        out_specs=(out_spec, out_spec),
        scratch_shapes=[pltpu.VMEM((sub, tp), jnp.float32),   # running sum(sim)
                        pltpu.VMEM((sub, tp), jnp.float32)],  # running sum(acos)
        compiler_params=pltpu.CompilerParams(
            dimension_semantics=("parallel", "parallel", "arbitrary"),
            vmem_limit_bytes=vmem_limit,
        ),
    )(x4, y4)

    # Tiny partial-sum combine + means (negligible work) in the wrapper.
    total_px = float(n * hw)
    mean_sim = jnp.sum(out_sim[:, :, 0, 0]) / total_px
    mean_ang = jnp.sum(out_ang[:, :, 0, 0]) / total_px
    return (1.0 - mean_sim) + mean_ang


def _color_loss_ref(x, y, eps=EPS):
    """Pure-JAX reference mirroring torch.nn.functional.cosine_similarity(dim=1)."""
    dot = jnp.sum(x * y, axis=1)
    nx = jnp.sqrt(jnp.sum(x * x, axis=1))
    ny = jnp.sqrt(jnp.sum(y * y, axis=1))
    sim = dot / (jnp.maximum(nx, eps) * jnp.maximum(ny, eps))
    distance = 1.0 - jnp.mean(sim)
    angle = jnp.mean(jnp.arccos(jnp.clip(sim, -1.0 + eps, 1.0 - eps)))
    return distance + angle


if __name__ == "__main__":
    key = jax.random.PRNGKey(0)
    kx, ky = jax.random.split(key)
    # Small shapes consistent with the module's NCHW forward.
    x = jax.random.normal(kx, (2, 4, 16, 16), dtype=jnp.float32)
    y = jax.random.normal(ky, (2, 4, 16, 16), dtype=jnp.float32)

    loss = jax.block_until_ready(color_loss(x, y))
    ref = _color_loss_ref(x, y)
    ok = abs(float(loss) - float(ref)) < 1e-3

    # Also exercise the tiled / ragged-tail / dual-parallel path at a small size
    # by forcing a tiny block target (hw8=200 -> two 128-lane tiles, masked tail).
    kx2, ky2 = jax.random.split(jax.random.PRNGKey(1))
    x2 = jax.random.normal(kx2, (1, 3, 40, 40), dtype=jnp.float32)
    y2 = jax.random.normal(ky2, (1, 3, 40, 40), dtype=jnp.float32)
    loss2 = jax.block_until_ready(color_loss(x2, y2, target_block_bytes=12 * 1024))
    ref2 = _color_loss_ref(x2, y2)
    ok = ok and abs(float(loss2) - float(ref2)) < 1e-3

    if ok:
        print("KERNEL_OK")
    else:
        print(f"MISMATCH pallas={float(loss)}/{float(loss2)} "
              f"ref={float(ref)}/{float(ref2)}")
</pallas_src>

<mosaic_0001>
module attributes {stable_mosaic.version = 11 : i64} {
  func.func @_color_loss_kernel(%arg0: i32, %arg1: i32, %arg2: i32, %arg3: memref<2x4x8x32xf32, #tpu.memory_space<vmem>>, %arg4: memref<2x4x8x32xf32, #tpu.memory_space<vmem>>, %arg5: memref<1x1x8x128xf32, #tpu.memory_space<vmem>>, %arg6: memref<1x1x8x128xf32, #tpu.memory_space<vmem>>, %arg7: memref<8x32xf32, #tpu.memory_space<vmem>>, %arg8: memref<8x32xf32, #tpu.memory_space<vmem>>) attributes {dimension_semantics = [#tpu.dimension_semantics<parallel>, #tpu.dimension_semantics<parallel>, #tpu.dimension_semantics<arbitrary>], iteration_bounds = array<i64: 1, 1, 1>, scalar_prefetch = 0 : i64, scratch_operands = 2 : i64, tpu.core_type = #tpu.core_type<tc>, window_params = [{transform_indices = @transform_0, window_bounds = array<i64: 2, 4, 8, 32>}, {transform_indices = @transform_1, window_bounds = array<i64: 2, 4, 8, 32>}, {transform_indices = @transform_2, window_bounds = array<i64: 1, 1, 8, 128>}, {transform_indices = @transform_3, window_bounds = array<i64: 1, 1, 8, 128>}]} {
    %c0_i32 = arith.constant 0 : i32
    %0 = arith.cmpi eq, %arg2, %c0_i32 : i32
    %1 = arith.extui %0 : i1 to i32
    %c0_i32_0 = arith.constant 0 : i32
    %2 = arith.cmpi ne, %1, %c0_i32_0 : i32
    scf.if %2 {
      %cst_38 = arith.constant 0.000000e+00 : f32
      %70 = vector.broadcast %cst_38 : f32 to vector<8x32xf32>
      %c0_39 = arith.constant 0 : index
      %c0_40 = arith.constant 0 : index
      %71 = vector.load %arg7[%c0_39, %c0_40] : memref<8x32xf32, #tpu.memory_space<vmem>>, vector<8x32xf32>
      tpu.vector_store %arg7[%c0_39, %c0_40], %70 {strides = array<i32>} : memref<8x32xf32, #tpu.memory_space<vmem>>, vector<8x32xf32>,
      %cst_41 = arith.constant 0.000000e+00 : f32
      %72 = vector.broadcast %cst_41 : f32 to vector<8x32xf32>
      %c0_42 = arith.constant 0 : index
      %c0_43 = arith.constant 0 : index
      %73 = vector.load %arg8[%c0_42, %c0_43] : memref<8x32xf32, #tpu.memory_space<vmem>>, vector<8x32xf32>
      tpu.vector_store %arg8[%c0_42, %c0_43], %72 {strides = array<i32>} : memref<8x32xf32, #tpu.memory_space<vmem>>, vector<8x32xf32>,
    } else {
    }
    %c0 = arith.constant 0 : index
    %c0_1 = arith.constant 0 : index
    %c0_2 = arith.constant 0 : index
    %c0_3 = arith.constant 0 : index
    %3 = vector.load %arg3[%c0, %c0_1, %c0_2, %c0_3] : memref<2x4x8x32xf32, #tpu.memory_space<vmem>>, vector<2x4x8x32xf32>
    %c0_4 = arith.constant 0 : index
    %c0_5 = arith.constant 0 : index
    %c0_6 = arith.constant 0 : index
    %c0_7 = arith.constant 0 : index
    %4 = vector.load %arg4[%c0_4, %c0_5, %c0_6, %c0_7] : memref<2x4x8x32xf32, #tpu.memory_space<vmem>>, vector<2x4x8x32xf32>
    %5 = arith.mulf %3, %4 : vector<2x4x8x32xf32>
    %cst = arith.constant dense<0.000000e+00> : vector<2x8x32xf32>
    %6 = vector.multi_reduction <add>, %5, %cst [1] : vector<2x4x8x32xf32> to vector<2x8x32xf32>
    %7 = arith.mulf %3, %3 : vector<2x4x8x32xf32>
    %cst_8 = arith.constant dense<0.000000e+00> : vector<2x8x32xf32>
    %8 = vector.multi_reduction <add>, %7, %cst_8 [1] : vector<2x4x8x32xf32> to vector<2x8x32xf32>
    %9 = arith.mulf %4, %4 : vector<2x4x8x32xf32>
    %cst_9 = arith.constant dense<0.000000e+00> : vector<2x8x32xf32>
    %10 = vector.multi_reduction <add>, %9, %cst_9 [1] : vector<2x4x8x32xf32> to vector<2x8x32xf32>
    %cst_10 = arith.constant 1.000000e-10 : f32
    %11 = vector.broadcast %cst_10 : f32 to vector<2x8x32xf32>
    %12 = arith.maximumf %8, %11 : vector<2x8x32xf32>
    %13 = math.rsqrt %12 : vector<2x8x32xf32>
    %cst_11 = arith.constant 1.000000e-10 : f32
    %14 = vector.broadcast %cst_11 : f32 to vector<2x8x32xf32>
    %15 = arith.maximumf %10, %14 : vector<2x8x32xf32>
    %16 = math.rsqrt %15 : vector<2x8x32xf32>
    %17 = arith.mulf %6, %13 : vector<2x8x32xf32>
    %18 = arith.mulf %17, %16 : vector<2x8x32xf32>
    %cst_12 = arith.constant -0.999989986 : f32
    %cst_13 = arith.constant 0.999989986 : f32
    %19 = vector.broadcast %cst_12 : f32 to vector<2x8x32xf32>
    %20 = arith.maximumf %19, %18 : vector<2x8x32xf32>
    %21 = vector.broadcast %cst_13 : f32 to vector<2x8x32xf32>
    %22 = arith.minimumf %21, %20 : vector<2x8x32xf32>
    %23 = math.absf %22 : vector<2x8x32xf32>
    %cst_14 = arith.constant 5.000000e-01 : f32
    %24 = vector.broadcast %cst_14 : f32 to vector<2x8x32xf32>
    %25 = arith.cmpf ogt, %23, %24 : vector<2x8x32xf32>
    %cst_15 = arith.constant 1.000000e+00 : f32
    %26 = vector.broadcast %cst_15 : f32 to vector<2x8x32xf32>
    %27 = arith.subf %26, %23 : vector<2x8x32xf32>
    %cst_16 = arith.constant 5.000000e-01 : f32
    %28 = vector.broadcast %cst_16 : f32 to vector<2x8x32xf32>
    %29 = arith.mulf %28, %27 : vector<2x8x32xf32>
    %30 = math.sqrt %29 : vector<2x8x32xf32>
    %31 = arith.select %25, %30, %23 : vector<2x8x32xi1>, vector<2x8x32xf32>
    %32 = arith.mulf %31, %31 : vector<2x8x32xf32>
    %cst_17 = arith.constant 4.216320e-02 : f32
    %33 = vector.broadcast %cst_17 : f32 to vector<2x8x32xf32>
    %34 = arith.mulf %33, %32 : vector<2x8x32xf32>
    %cst_18 = arith.constant 0.024181312 : f32
    %35 = vector.broadcast %cst_18 : f32 to vector<2x8x32xf32>
    %36 = arith.addf %34, %35 : vector<2x8x32xf32>
    %37 = arith.mulf %36, %32 : vector<2x8x32xf32>
    %cst_19 = arith.constant 0.0454700254 : f32
    %38 = vector.broadcast %cst_19 : f32 to vector<2x8x32xf32>
    %39 = arith.addf %37, %38 : vector<2x8x32xf32>
    %40 = arith.mulf %39, %32 : vector<2x8x32xf32>
    %cst_20 = arith.constant 0.0749530047 : f32
    %41 = vector.broadcast %cst_20 : f32 to vector<2x8x32xf32>
    %42 = arith.addf %40, %41 : vector<2x8x32xf32>
    %43 = arith.mulf %42, %32 : vector<2x8x32xf32>
    %cst_21 = arith.constant 0.166667521 : f32
    %44 = vector.broadcast %cst_21 : f32 to vector<2x8x32xf32>
    %45 = arith.addf %43, %44 : vector<2x8x32xf32>
    %46 = arith.mulf %45, %32 : vector<2x8x32xf32>
    %47 = arith.mulf %46, %31 : vector<2x8x32xf32>
    %48 = arith.addf %47, %31 : vector<2x8x32xf32>
    %cst_22 = arith.constant 2.000000e+00 : f32
    %49 = vector.broadcast %cst_22 : f32 to vector<2x8x32xf32>
    %50 = arith.mulf %49, %48 : vector<2x8x32xf32>
    %cst_23 = arith.constant 1.57079637 : f32
    %51 = vector.broadcast %cst_23 : f32 to vector<2x8x32xf32>
    %52 = arith.subf %51, %48 : vector<2x8x32xf32>
    %53 = arith.select %25, %50, %52 : vector<2x8x32xi1>, vector<2x8x32xf32>
    %cst_24 = arith.constant 0.000000e+00 : f32
    %54 = vector.broadcast %cst_24 : f32 to vector<2x8x32xf32>
    %55 = arith.cmpf olt, %22, %54 : vector<2x8x32xf32>
    %cst_25 = arith.constant 3.14159274 : f32
    %56 = vector.broadcast %cst_25 : f32 to vector<2x8x32xf32>
    %57 = arith.subf %56, %53 : vector<2x8x32xf32>
    %58 = arith.select %55, %57, %53 : vector<2x8x32xi1>, vector<2x8x32xf32>
    %cst_26 = arith.constant dense<0.000000e+00> : vector<8x32xf32>
    %59 = vector.multi_reduction <add>, %18, %cst_26 [0] : vector<2x8x32xf32> to vector<8x32xf32>
    %cst_27 = arith.constant dense<0.000000e+00> : vector<8x32xf32>
    %60 = vector.multi_reduction <add>, %58, %cst_27 [0] : vector<2x8x32xf32> to vector<8x32xf32>
    %c0_28 = arith.constant 0 : index
    %c0_29 = arith.constant 0 : index
    %61 = vector.load %arg7[%c0_28, %c0_29] : memref<8x32xf32, #tpu.memory_space<vmem>>, vector<8x32xf32>
    %62 = arith.addf %61, %59 : vector<8x32xf32>
    %c0_30 = arith.constant 0 : index
    %c0_31 = arith.constant 0 : index
    %63 = vector.load %arg7[%c0_30, %c0_31] : memref<8x32xf32, #tpu.memory_space<vmem>>, vector<8x32xf32>
    tpu.vector_store %arg7[%c0_30, %c0_31], %62 {strides = array<i32>} : memref<8x32xf32, #tpu.memory_space<vmem>>, vector<8x32xf32>,
    %c0_32 = arith.constant 0 : index
    %c0_33 = arith.constant 0 : index
    %64 = vector.load %arg8[%c0_32, %c0_33] : memref<8x32xf32, #tpu.memory_space<vmem>>, vector<8x32xf32>
    %65 = arith.addf %64, %60 : vector<8x32xf32>
    %c0_34 = arith.constant 0 : index
    %c0_35 = arith.constant 0 : index
    %66 = vector.load %arg8[%c0_34, %c0_35] : memref<8x32xf32, #tpu.memory_space<vmem>>, vector<8x32xf32>
    tpu.vector_store %arg8[%c0_34, %c0_35], %65 {strides = array<i32>} : memref<8x32xf32, #tpu.memory_space<vmem>>, vector<8x32xf32>,
    %c0_i32_36 = arith.constant 0 : i32
    %67 = arith.cmpi eq, %arg2, %c0_i32_36 : i32
    %68 = arith.extui %67 : i1 to i32
    %c0_i32_37 = arith.constant 0 : i32
    %69 = arith.cmpi ne, %68, %c0_i32_37 : i32
    scf.if %69 {
      %c0_38 = arith.constant 0 : index
      %c0_39 = arith.constant 0 : index
      %70 = vector.load %arg7[%c0_38, %c0_39] : memref<8x32xf32, #tpu.memory_space<vmem>>, vector<8x32xf32>
      %71 = vector.shape_cast %70 : vector<8x32xf32> to vector<1x8x32xf32>
      %cst_40 = arith.constant dense<0.000000e+00> : vector<1xf32>
      %72 = vector.multi_reduction <add>, %71, %cst_40 [1, 2] : vector<1x8x32xf32> to vector<1xf32>
      %73 = vector.shape_cast %72 : vector<1xf32> to vector<1x1x1xf32>
      %74 = vector.extract %73[0, 0, 0] : f32 from vector<1x1x1xf32>
      %75 = vector.broadcast %74 : f32 to vector<1x1x8x128xf32>
      %c0_41 = arith.constant 0 : index
      %c0_42 = arith.constant 0 : index
      %c0_43 = arith.constant 0 : index
      %c0_44 = arith.constant 0 : index
      %76 = vector.load %arg5[%c0_41, %c0_42, %c0_43, %c0_44] : memref<1x1x8x128xf32, #tpu.memory_space<vmem>>, vector<1x1x8x128xf32>
      tpu.vector_store %arg5[%c0_41, %c0_42, %c0_43, %c0_44], %75 {strides = array<i32>} : memref<1x1x8x128xf32, #tpu.memory_space<vmem>>, vector<1x1x8x128xf32>,
      %c0_45 = arith.constant 0 : index
      %c0_46 = arith.constant 0 : index
      %77 = vector.load %arg8[%c0_45, %c0_46] : memref<8x32xf32, #tpu.memory_space<vmem>>, vector<8x32xf32>
      %78 = vector.shape_cast %77 : vector<8x32xf32> to vector<1x8x32xf32>
      %cst_47 = arith.constant dense<0.000000e+00> : vector<1xf32>
      %79 = vector.multi_reduction <add>, %78, %cst_47 [1, 2] : vector<1x8x32xf32> to vector<1xf32>
      %80 = vector.shape_cast %79 : vector<1xf32> to vector<1x1x1xf32>
      %81 = vector.extract %80[0, 0, 0] : f32 from vector<1x1x1xf32>
      %82 = vector.broadcast %81 : f32 to vector<1x1x8x128xf32>
      %c0_48 = arith.constant 0 : index
      %c0_49 = arith.constant 0 : index
      %c0_50 = arith.constant 0 : index
      %c0_51 = arith.constant 0 : index
      %83 = vector.load %arg6[%c0_48, %c0_49, %c0_50, %c0_51] : memref<1x1x8x128xf32, #tpu.memory_space<vmem>>, vector<1x1x8x128xf32>
      tpu.vector_store %arg6[%c0_48, %c0_49, %c0_50, %c0_51], %82 {strides = array<i32>} : memref<1x1x8x128xf32, #tpu.memory_space<vmem>>, vector<1x1x8x128xf32>,
    } else {
    }
    return
  }
  func.func @transform_0(%arg0: i32, %arg1: i32, %arg2: i32) -> (i32, i32, i32, i32) {
    %c1_i32 = arith.constant 1 : i32
    %0 = arith.muli %arg1, %c1_i32 : i32
    %1 = arith.addi %0, %arg2 : i32
    %c0_i32 = arith.constant 0 : i32
    %c0_i32_0 = arith.constant 0 : i32
    %c0_i32_1 = arith.constant 0 : i32
    return %arg0, %c0_i32, %c0_i32_0, %1 : i32, i32, i32, i32
  }
  func.func @transform_1(%arg0: i32, %arg1: i32, %arg2: i32) -> (i32, i32, i32, i32) {
    %c1_i32 = arith.constant 1 : i32
    %0 = arith.muli %arg1, %c1_i32 : i32
    %1 = arith.addi %0, %arg2 : i32
    %c0_i32 = arith.constant 0 : i32
    %c0_i32_0 = arith.constant 0 : i32
    %c0_i32_1 = arith.constant 0 : i32
    return %arg0, %c0_i32, %c0_i32_0, %1 : i32, i32, i32, i32
  }
  func.func @transform_2(%arg0: i32, %arg1: i32, %arg2: i32) -> (i32, i32, i32, i32) {
    %c0_i32 = arith.constant 0 : i32
    %c0_i32_0 = arith.constant 0 : i32
    %c0_i32_1 = arith.constant 0 : i32
    return %arg0, %arg1, %c0_i32, %c0_i32_0 : i32, i32, i32, i32
  }
  func.func @transform_3(%arg0: i32, %arg1: i32, %arg2: i32) -> (i32, i32, i32, i32) {
    %c0_i32 = arith.constant 0 : i32
    %c0_i32_0 = arith.constant 0 : i32
    %c0_i32_1 = arith.constant 0 : i32
    return %arg0, %arg1, %c0_i32, %c0_i32_0 : i32, i32, i32, i32
  }
}

</mosaic_0001>

<llo_original>
// kernel: tpu_custom_call.1
$region0: #{tpu_custom_call.1}
  #allocation0 [shape = 'u32[]', space=smem, size = 0x4, offset = 0x4, fixed_abs, tag = 'smem constant byte address 0x4 - core index']
  #allocation1 [shape = 'u32[144,128]{1,0:T(1,128)}', space=vmem, size = 0x12000, scoped, tag = 'internal scratch']
  #allocation2 [shape = 'f32[8,32]{1,0:T(8,128)}', space=vmem, size = 0x1000, scoped, tag = 'scratch operand']
  #allocation3 [shape = 'f32[8,32]{1,0:T(8,128)}', space=vmem, size = 0x1000, scoped, tag = 'scratch operand']
  %s0 = inlined_call_operand.hbm [shape: f32[2,4,8,32], index: 0, kind: input, shape index: {}]
  %s1 = inlined_call_operand.hbm [shape: f32[2,4,8,32], index: 1, kind: input, shape index: {}]
  %s2 = inlined_call_operand.hbm [shape: f32[1,1,8,128], index: 2, kind: output, shape index: {0}]
  %s3 = inlined_call_operand.hbm [shape: f32[1,1,8,128], index: 3, kind: output, shape index: {1}]
  %4 = xla_tuple %s2, %s3
  %s5 = sld [smem:[#allocation0]]
  $region42: #{tpu_custom_call.1} parent=0
    _
  %s7 = ssub.s32 1, %s5
  %s8 = scalar_select 0, %s7, %s5
  $region1: #{tpu_custom_call.1} parent=0
    #allocation4 [shape = 'u8[32768]{0}', space=vmem, size = 0x8000, scoped, tag = 'input window, operand 0, single buffered']
    #allocation5 [shape = 's32[1]{0}', space=sflag, size = 0x4, scoped, tag = 'scoped memory for tpu_custom_call.1']
    #allocation6 [shape = 's32[1]{0}', space=sflag, size = 0x4, scoped, tag = 'scoped memory for tpu_custom_call.1']
    #allocation7 [shape = 'u8[32768]{0}', space=vmem, size = 0x8000, scoped, tag = 'input window, operand 1, single buffered']
    #allocation8 [shape = 's32[1]{0}', space=sflag, size = 0x4, scoped, tag = 'scoped memory for tpu_custom_call.1']
    #allocation9 [shape = 'u8[4096]{0}', space=vmem, size = 0x1000, scoped, tag = 'output window, operand 0, single buffered']
    #allocation10 [shape = 'u8[4096]{0}', space=vmem, size = 0x1000, scoped, tag = 'output window, operand 1, single buffered']
    #allocation11 [shape = 's32[1]{0}', space=sflag, size = 0x4, scoped, tag = 'scoped memory for tpu_custom_call.1']
    %9 = vsyncpa [#allocation5], 0
    %10 = vsyncpa [#allocation8], 0
    %11 = vsyncpa [#allocation6], 0
    %12 = vsyncpa [#allocation11], 0
    // Predicated region
    $region2: #{tpu_custom_call.1} parent=1 // pred_check
      _
    $region3: #{tpu_custom_call.1} parent=1 // pred_check_branch
      %14 = sbr.rel (0) target = $region5
    $region4: #{tpu_custom_call.1} parent=1 // pred_region
      %s15 = sadd.s32 0, 0
      %s17 = ssub.s32 1024, 1024
      %18 = vsyncadd [#allocation5], %s17
      %s19 = smul.addr %s15, 128
      %s20 = scalar_lea.hbm %s0, %s19
      %s21 = sshll.u32 [#allocation4], 4
      %s22 = int_to_ptr.vmem [resolvable:$true] %s21
      %27 = dma.hbm_to_vmem [thread:$0]  %s20, 1024, %s22, [#allocation5], 128, 128, 8
    $region5: #{tpu_custom_call.1} parent=1 // pred_fallthru
      _
    // Predicated region
    $region6: #{tpu_custom_call.1} parent=1 // pred_check
      _
    $region7: #{tpu_custom_call.1} parent=1 // pred_check_branch
      %29 = sbr.rel (0) target = $region9
    $region8: #{tpu_custom_call.1} parent=1 // pred_region
      %s30 = sadd.s32 0, 0
      %s32 = ssub.s32 1024, 1024
      %33 = vsyncadd [#allocation8], %s32
      %s34 = smul.addr %s30, 128
      %s35 = scalar_lea.hbm %s1, %s34
      %s36 = sshll.u32 [#allocation7], 4
      %s37 = int_to_ptr.vmem [resolvable:$true] %s36
      %42 = dma.hbm_to_vmem [thread:$0]  %s35, 1024, %s37, [#allocation8], 128, 128, 8
    $region9: #{tpu_custom_call.1} parent=1 // pred_fallthru
      _
    // Predicated region
    $region10: #{tpu_custom_call.1} parent=1 // pred_check
      _
    $region11: #{tpu_custom_call.1} parent=1 // pred_check_branch
      %44 = sbr.rel (0) target = $region13
    $region12: #{tpu_custom_call.1} parent=1 // pred_region
      %45 = dma.done [#allocation5], 1024
    $region13: #{tpu_custom_call.1} parent=1 // pred_fallthru
      _
    // Predicated region
    $region14: #{tpu_custom_call.1} parent=1 // pred_check
      _
    $region15: #{tpu_custom_call.1} parent=1 // pred_check_branch
      %47 = sbr.rel (0) target = $region17
    $region16: #{tpu_custom_call.1} parent=1 // pred_region
      %48 = dma.done [#allocation8], 1024
    $region17: #{tpu_custom_call.1} parent=1 // pred_fallthru
      _
    %s49 = sadd.s32 0, 0
    %s50 = sadd.s32 0, 0
    %p51 = scmp.eq.s32.totalorder 0, 0
    // Predicated region
    $region18: #{tpu_custom_call.1} parent=1 // pred_check
      %p52 = pneg %p51
    $region19: #{tpu_custom_call.1} parent=1 // pred_check_branch
      %54 = sbr.rel (%p52) target = $region21
    $region20: #{tpu_custom_call.1} parent=1 // pred_region
      %vm55 = vcmask 261120
      %56 = vst.msk [vmem:[#allocation2] sm:$0xff] %vm55, 0.0
      %57 = vst.msk [vmem:[#allocation3] sm:$0xff] %vm55, 0.0
    $region21: #{tpu_custom_call.1} parent=1 // pred_fallthru
      _
    %v58 = vld [vmem:[#allocation4] sm:$0xff]
    %v59 = vld [vmem:[#allocation4 + $0x8] sm:$0xff]
    %v60 = vld [vmem:[#allocation4 + $0x10] sm:$0xff]
    %v61 = vld [vmem:[#allocation4 + $0x18] sm:$0xff]
    %v62 = vld [vmem:[#allocation4 + $0x20] sm:$0xff]
    %v63 = vld [vmem:[#allocation4 + $0x28] sm:$0xff]
    %v64 = vld [vmem:[#allocation4 + $0x30] sm:$0xff]
    %v65 = vld [vmem:[#allocation4 + $0x38] sm:$0xff]
    %v66 = vld [vmem:[#allocation7] sm:$0xff]
    %v67 = vld [vmem:[#allocation7 + $0x8] sm:$0xff]
    %v68 = vld [vmem:[#allocation7 + $0x10] sm:$0xff]
    %v69 = vld [vmem:[#allocation7 + $0x18] sm:$0xff]
    %v70 = vld [vmem:[#allocation7 + $0x20] sm:$0xff]
    %v71 = vld [vmem:[#allocation7 + $0x28] sm:$0xff]
    %v72 = vld [vmem:[#allocation7 + $0x30] sm:$0xff]
    %v73 = vld [vmem:[#allocation7 + $0x38] sm:$0xff]
    %v74 = vmul.f32 %v58, %v66
    %v75 = vmul.f32 %v59, %v67
    %v76 = vmul.f32 %v60, %v68
    %v77 = vmul.f32 %v61, %v69
    %v78 = vmul.f32 %v62, %v70
    %v79 = vmul.f32 %v63, %v71
    %v80 = vmul.f32 %v64, %v72
    %v81 = vmul.f32 %v65, %v73
    %vm82 = vcmask 261120
    %v83 = vsel %vm82, %v74, 0.0
    %v84 = vsel %vm82, %v75, 0.0
    %v85 = vadd.f32 %v83, %v84
    %v86 = vsel %vm82, %v76, 0.0
    %v87 = vadd.f32 %v85, %v86
    %v88 = vsel %vm82, %v77, 0.0
    %v89 = vadd.f32 %v87, %v88
    %v90 = vsel %vm82, %v78, 0.0
    %v91 = vsel %vm82, %v79, 0.0
    %v92 = vadd.f32 %v90, %v91
    %v93 = vsel %vm82, %v80, 0.0
    %v94 = vadd.f32 %v92, %v93
    %v95 = vsel %vm82, %v81, 0.0
    %v96 = vadd.f32 %v94, %v95
    %v97 = vmul.f32 %v58, %v58
    %v98 = vmul.f32 %v59, %v59
    %v99 = vmul.f32 %v60, %v60
    %v100 = vmul.f32 %v61, %v61
    %v101 = vmul.f32 %v62, %v62
    %v102 = vmul.f32 %v63, %v63
    %v103 = vmul.f32 %v64, %v64
    %v104 = vmul.f32 %v65, %v65
    %v105 = vsel %vm82, %v97, 0.0
    %v106 = vsel %vm82, %v98, 0.0
    %v107 = vadd.f32 %v105, %v106
    %v108 = vsel %vm82, %v99, 0.0
    %v109 = vadd.f32 %v107, %v108
    %v110 = vsel %vm82, %v100, 0.0
    %v111 = vadd.f32 %v109, %v110
    %v112 = vsel %vm82, %v101, 0.0
    %v113 = vsel %vm82, %v102, 0.0
    %v114 = vadd.f32 %v112, %v113
    %v115 = vsel %vm82, %v103, 0.0
    %v116 = vadd.f32 %v114, %v115
    %v117 = vsel %vm82, %v104, 0.0
    %v118 = vadd.f32 %v116, %v117
    %v119 = vmul.f32 %v66, %v66
    %v120 = vmul.f32 %v67, %v67
    %v121 = vmul.f32 %v68, %v68
    %v122 = vmul.f32 %v69, %v69
    %v123 = vmul.f32 %v70, %v70
    %v124 = vmul.f32 %v71, %v71
    %v125 = vmul.f32 %v72, %v72
    %v126 = vmul.f32 %v73, %v73
    %v127 = vsel %vm82, %v119, 0.0
    %v128 = vsel %vm82, %v120, 0.0
    %v129 = vadd.f32 %v127, %v128
    %v130 = vsel %vm82, %v121, 0.0
    %v131 = vadd.f32 %v129, %v130
    %v132 = vsel %vm82, %v122, 0.0
    %v133 = vadd.f32 %v131, %v132
    %v134 = vsel %vm82, %v123, 0.0
    %v135 = vsel %vm82, %v124, 0.0
    %v136 = vadd.f32 %v134, %v135
    %v137 = vsel %vm82, %v125, 0.0
    %v138 = vadd.f32 %v136, %v137
    %v139 = vsel %vm82, %v126, 0.0
    %v140 = vadd.f32 %v138, %v139
    %v141 = vmax.f32 %v111, 1e-10
    %v142 = vmax.f32 %v118, 1e-10
    %v143 = vrsqrt.pop %v141
    %v144 = vrsqrt.pop %v142
    %v145 = vmax.f32 %v133, 1e-10
    %v146 = vmax.f32 %v140, 1e-10
    %v147 = vrsqrt.pop %v145
    %v148 = vrsqrt.pop %v146
    %v149 = vmul.f32 %v89, %v143
    %v150 = vmul.f32 %v96, %v144
    %v151 = vmul.f32 %v149, %v147
    %v152 = vmul.f32 %v150, %v148
    %v153 = vmax.f32 %v151, -0.99999
    %v154 = vmax.f32 %v152, -0.99999
    %v155 = vmin.f32 %v153, 0.99999
    %v156 = vmin.f32 %v154, 0.99999
    %v157 = vand.u32 2147483647, %v155
    %v158 = vand.u32 2147483647, %v156
    %vm159 = vcmp.gt.f32.partialorder %v157, 0.5
    %vm160 = vcmp.gt.f32.partialorder %v158, 0.5
    %v161 = vsub.f32 1.0, %v157
    %v162 = vsub.f32 1.0, %v158
    %v163 = vmul.f32 %v161, 0.5
    %v164 = vmul.f32 %v162, 0.5
    %v165 = vrsqrt.pop %v163
    %v166 = vmul.f32 %v163, %v165
    %vm167 = vcmp.eq.f32.partialorder %v163, inf
    %v168 = vsel %vm167, %v163, %v166
    %vm169 = vcmp.eq.f32.partialorder %v163, 0.0
    %v170 = vand.u32 %v163, 2147483648
    %v171 = vsel %vm169, %v170, %v168
    %v172 = vrsqrt.pop %v164
    %v173 = vmul.f32 %v164, %v172
    %vm174 = vcmp.eq.f32.partialorder %v164, inf
    %v175 = vsel %vm174, %v164, %v173
    %vm176 = vcmp.eq.f32.partialorder %v164, 0.0
    %v177 = vand.u32 %v164, 2147483648
    %v178 = vsel %vm176, %v177, %v175
    %v179 = vsel %vm159, %v171, %v157
    %v180 = vsel %vm160, %v178, %v158
    %v181 = vmul.f32 %v179, %v179
    %v182 = vmul.f32 %v180, %v180
    %v183 = vmul.f32 %v181, 0.0421632
    %v184 = vmul.f32 %v182, 0.0421632
    %v185 = vadd.f32 %v183, 0.024181312
    %v186 = vadd.f32 %v184, 0.024181312
    %v187 = vmul.f32 %v185, %v181
    %v188 = vmul.f32 %v186, %v182
    %v189 = vadd.f32 %v187, 0.045470025
    %v190 = vadd.f32 %v188, 0.045470025
    %v191 = vmul.f32 %v189, %v181
    %v192 = vmul.f32 %v190, %v182
    %v193 = vadd.f32 %v191, 0.074953005
    %v194 = vadd.f32 %v192, 0.074953005
    %v195 = vmul.f32 %v193, %v181
    %v196 = vmul.f32 %v194, %v182
    %v197 = vadd.f32 %v195, 0.16666752
    %v198 = vadd.f32 %v196, 0.16666752
    %v199 = vmul.f32 %v197, %v181
    %v200 = vmul.f32 %v198, %v182
    %v201 = vmul.f32 %v199, %v179
    %v202 = vmul.f32 %v200, %v180
    %v203 = vadd.f32 %v201, %v179
    %v204 = vadd.f32 %v202, %v180
    %v205 = vmul.f32 %v203, 2.0
    %v206 = vmul.f32 %v204, 2.0
    %v207 = vsub.f32 1.5707964, %v203
    %v208 = vsub.f32 1.5707964, %v204
    %v209 = vsel %vm159, %v205, %v207
    %v210 = vsel %vm160, %v206, %v208
    %vm211 = vcmp.lt.f32.partialorder %v155, 0.0
    %vm212 = vcmp.lt.f32.partialorder %v156, 0.0
    %v213 = vsub.f32 3.1415927, %v209
    %v214 = vsub.f32 3.1415927, %v210
    %v215 = vsel %vm211, %v213, %v209
    %v216 = vsel %vm212, %v214, %v210
    %v217 = vsel %vm82, %v151, 0.0
    %v218 = vsel %vm82, %v152, 0.0
    %v219 = vadd.f32 %v217, %v218
    %v220 = vsel %vm82, %v215, 0.0
    %v221 = vsel %vm82, %v216, 0.0
    %v222 = vadd.f32 %v220, %v221
    %v223 = vld [vmem:[#allocation2] sm:$0xff]
    %v224 = vadd.f32 %v223, %v219
    %225 = vst.msk [vmem:[#allocation2] sm:$0xff] %vm82, %v224
    %v226 = vld [vmem:[#allocation3] sm:$0xff]
    %v227 = vadd.f32 %v226, %v222
    %228 = vst.msk [vmem:[#allocation3] sm:$0xff] %vm82, %v227
    // Predicated region
    $region22: #{tpu_custom_call.1} parent=1 // pred_check
      %p229 = pneg %p51
    $region23: #{tpu_custom_call.1} parent=1 // pred_check_branch
      %231 = sbr.rel (%p229) target = $region25
    $region24: #{tpu_custom_call.1} parent=1 // pred_region
      %v232 = vld [vmem:[#allocation2] sm:$0xff]
      %v233 = vsel %vm82, %v232, 0.0
      %234 = vadd.xlane.f32.xlu0 %v233
      %v235 = vpop.xlane.xlu0 %234
      %v236 = vrot.slane %v235, 4
      %v237 = vadd.f32 %v235, %v236
      %v238 = vrot.slane %v237, 2
      %v239 = vadd.f32 %v237, %v238
      %v240 = vrot.slane %v239, 1
      %v241 = vadd.f32 %v239, %v240
      %s242 = vtos %v241
      %v243 = vstv %s242
      %244 = vst [vmem:[#allocation9] sm:$0xff] %v243
      %v245 = vld [vmem:[#allocation3] sm:$0xff]
      %v246 = vsel %vm82, %v245, 0.0
      %247 = vadd.xlane.f32.xlu0 %v246
      %v248 = vpop.xlane.xlu0 %247
      %v249 = vrot.slane %v248, 4
      %v250 = vadd.f32 %v248, %v249
      %v251 = vrot.slane %v250, 2
      %v252 = vadd.f32 %v250, %v251
      %v253 = vrot.slane %v252, 1
      %v254 = vadd.f32 %v252, %v253
      %s255 = vtos %v254
      %v256 = vstv %s255
      %257 = vst [vmem:[#allocation10] sm:$0xff] %v256
    $region25: #{tpu_custom_call.1} parent=1 // pred_fallthru
      _
    // Predicated region
    $region26: #{tpu_custom_call.1} parent=1 // pred_check
      _
    $region27: #{tpu_custom_call.1} parent=1 // pred_check_branch
      %259 = sbr.rel (0) target = $region29
    $region28: #{tpu_custom_call.1} parent=1 // pred_region
      %s261 = ssub.s32 128, 128
      %262 = vsyncadd [#allocation6], %s261
      %s264 = sshll.u32 [#allocation9], 4
      %s265 = int_to_ptr.vmem [resolvable:$true] %s264
      %267 = dma.vmem_to_hbm [thread:$0]  %s265, 128, %s2, [#allocation6]
    $region29: #{tpu_custom_call.1} parent=1 // pred_fallthru
      _
    // Predicated region
    $region30: #{tpu_custom_call.1} parent=1 // pred_check
      _
    $region31: #{tpu_custom_call.1} parent=1 // pred_check_branch
      %269 = sbr.rel (0) target = $region33
    $region32: #{tpu_custom_call.1} parent=1 // pred_region
      %s271 = ssub.s32 128, 128
      %272 = vsyncadd [#allocation11], %s271
      %s274 = sshll.u32 [#allocation10], 4
      %s275 = int_to_ptr.vmem [resolvable:$true] %s274
      %277 = dma.vmem_to_hbm [thread:$0]  %s275, 128, %s3, [#allocation11]
    $region33: #{tpu_custom_call.1} parent=1 // pred_fallthru
      _
    // Predicated region
    $region34: #{tpu_custom_call.1} parent=1 // pred_check
      _
    $region35: #{tpu_custom_call.1} parent=1 // pred_check_branch
      %279 = sbr.rel (0) target = $region37
    $region36: #{tpu_custom_call.1} parent=1 // pred_region
      %280 = dma.done [#allocation6], 128
    $region37: #{tpu_custom_call.1} parent=1 // pred_fallthru
      _
    // Predicated region
    $region38: #{tpu_custom_call.1} parent=1 // pred_check
      _
    $region39: #{tpu_custom_call.1} parent=1 // pred_check_branch
      %282 = sbr.rel (0) target = $region41
    $region40: #{tpu_custom_call.1} parent=1 // pred_region
      %283 = dma.done [#allocation11], 128
    $region41: #{tpu_custom_call.1} parent=1 // pred_fallthru
      _
    %284 = vsyncpa [#allocation5], 1
    %285 = vsyncpa [#allocation8], 1
    %286 = vsyncpa [#allocation6], 1
    %287 = vsyncpa [#allocation11], 1

</llo_original>
